<compile_context>
chip_gen: v5e
topology: v5e:2x2
jax: 0.10.0
libtpu: 0.0.40
codegen_flags: <defaults>
</compile_context>

<pallas_src>
import functools
import math

import jax
import jax.numpy as jnp
from jax.experimental import pallas as pl
from jax.experimental.pallas import tpu as pltpu


def _round_up(x, m):
    return (x + m - 1) // m * m


def _gate_conv_kernel(x_ref, w_ref, b_ref, o_ref, patch_ref, *,
                      KH, KW, Cin_p, Wp, NB, Lpad, Cout):
    """One grid step = NB batch elements.

    x_ref    : (NB, Cin_p, Lflat)   flattened zero-padded images (Cin padded to 8)
    w_ref    : (2*NB*Cout, NB*K)    block-diag weights: rows [0, NB*Cout) = x-half,
                                    rows [NB*Cout, 2*NB*Cout) = gate-half
    b_ref    : (2*NB*Cout, 1)       bias in the matching row layout
    o_ref    : (NB*Cout, Lpad)      gated output, batch stacked on sublanes
    patch_ref: (NB*K, Lpad)         im2col scratch, batch stacked on sublane row-blocks
    """
    K = KH * KW * Cin_p

    # im2col: destination rows start at multiples of 8 and span the full multiple-of-128
    # lane width -> unmasked stores.  (Source slices need one XLU rotate each; accepted.)
    for nb in range(NB):
        for kh in range(KH):
            for kw in range(KW):
                s = kh * Wp + kw
                r = nb * K + (kh * KW + kw) * Cin_p
                patch_ref[r:r + Cin_p, :] = x_ref[nb, :, s:s + Lpad]

    # Single merged MXU contraction: M = 2*NB*Cout (16), K = NB*K (144), N = Lpad (384).
    acc = jnp.dot(w_ref[...], patch_ref[...], preferred_element_type=jnp.float32)
    acc = acc + b_ref[...]                       # (rows, 1) broadcast along lanes

    # Gating epilogue: x / gate halves are aligned 8-sublane groups -> full-vreg VPU
    # multiply + EUP sigmoid, one unmasked (NB*Cout, Lpad) store.
    nco = NB * Cout
    o_ref[...] = (acc[:nco, :] * jax.nn.sigmoid(acc[nco:, :])).astype(o_ref.dtype)


def gate_conv(x_nchw, weight_oihw, bias, *, stride=1, padding=1):
    """GateConv forward (Conv2d path).  x: (N,Cin,H,W); weight: (2*Cout,Cin,KH,KW); bias: (2*Cout,)."""
    if stride != 1:
        raise NotImplementedError("gate_conv Pallas kernel supports stride=1 only")

    N, Cin, H, W = x_nchw.shape
    Cout2, _, KH, KW = weight_oihw.shape
    Cout = Cout2 // 2

    Hp, Wp = H + 2 * padding, W + 2 * padding
    Ho, Wo = Hp - KH + 1, Wp - KW + 1            # stride = 1

    Cin_p = _round_up(Cin, 8)                    # full-sublane im2col row blocks
    K = KH * KW * Cin_p
    L = Ho * Wp                                  # valid flattened output length / image
    Lpad = _round_up(L, 128)                     # lane-dense patch / output width
    NB = 8 // math.gcd(Cout, 8)                  # batch per step so NB*Cout % 8 == 0
    Npad = _round_up(max(N, NB), NB)
    G = Npad // NB
    Lflat = _round_up((KH - 1) * Wp + (KW - 1) + Lpad, 128)

    # ---- wrapper-side layout plumbing only (zero pads / reshape / block-diag weight) ----
    # TODO(synk): for large H*W fold the zero padding into the kernel to avoid the extra
    # HBM round-trip; negligible at 16x16.
    xp = jnp.pad(x_nchw, ((0, Npad - N), (0, Cin_p - Cin),
                          (padding, padding), (padding, padding)))
    x_flat = xp.reshape(Npad, Cin_p, Hp * Wp)
    x_flat = jnp.pad(x_flat, ((0, 0), (0, 0), (0, Lflat - Hp * Wp)))

    # OIHW -> (O, KH*KW*Cin_p) rows matching the im2col row order (Cin zero-padded).
    w_mat = jnp.transpose(weight_oihw, (0, 2, 3, 1))
    w_mat = jnp.pad(w_mat, ((0, 0), (0, 0), (0, 0), (0, Cin_p - Cin)))
    w_mat = w_mat.reshape(Cout2, K)
    eye = jnp.eye(NB, dtype=w_mat.dtype)
    w_big = jnp.concatenate([jnp.kron(eye, w_mat[:Cout]),            # x half (block-diag)
                             jnp.kron(eye, w_mat[Cout:])], axis=0)   # gate half
    b_big = jnp.concatenate([jnp.tile(bias[:Cout], NB),
                             jnp.tile(bias[Cout:], NB)]).reshape(2 * NB * Cout, 1)

    kernel = functools.partial(_gate_conv_kernel, KH=KH, KW=KW, Cin_p=Cin_p,
                               Wp=Wp, NB=NB, Lpad=Lpad, Cout=Cout)

    out_flat = pl.pallas_call(
        kernel,
        out_shape=jax.ShapeDtypeStruct((Npad * Cout, Lpad), x_nchw.dtype),
        grid=(G,),
        in_specs=[
            pl.BlockSpec((NB, Cin_p, Lflat), lambda n: (n, 0, 0)),
            pl.BlockSpec((2 * NB * Cout, NB * K), lambda n: (0, 0)),  # VMEM-resident
            pl.BlockSpec((2 * NB * Cout, 1), lambda n: (0, 0)),
        ],
        out_specs=pl.BlockSpec((NB * Cout, Lpad), lambda n: (n, 0)),
        scratch_shapes=[pltpu.VMEM((NB * K, Lpad), jnp.float32)],
        compiler_params=pltpu.CompilerParams(dimension_semantics=("parallel",)),
    )(x_flat, w_big, b_big)

    # Drop padded batches, padded columns (>= L) and the wrap-around columns (wo >= Wo).
    out = out_flat.reshape(Npad, Cout, Lpad)[:N, :, :L]
    return out.reshape(N, Cout, Ho, Wp)[:, :, :, :Wo]


def gate_conv_reference(x_nchw, weight_oihw, bias, *, padding=1):
    """Pure-JAX reference reproducing the PyTorch module semantics."""
    Cout = weight_oihw.shape[0] // 2
    y = jax.lax.conv_general_dilated(
        x_nchw, weight_oihw, window_strides=(1, 1),
        padding=((padding, padding), (padding, padding)),
        dimension_numbers=("NCHW", "OIHW", "NCHW"))
    y = y + bias[None, :, None, None]
    xh, g = y[:, :Cout], y[:, Cout:]
    return xh * jax.nn.sigmoid(g)


if __name__ == "__main__":
    # GateConv(in_channels=4, out_channels=4, kernel_size=3, stride=1, padding=1)
    N, Cin, H, W = 2, 4, 16, 16
    Cout, KH, KW, padding = 4, 3, 3, 1

    key = jax.random.PRNGKey(0)
    k_x, k_w, k_b = jax.random.split(key, 3)

    x = jax.random.normal(k_x, (N, Cin, H, W), jnp.float32)
    # Deterministic PyTorch-style init: U(-1/sqrt(fan_in), 1/sqrt(fan_in)).
    fan_in = Cin * KH * KW
    bound = 1.0 / math.sqrt(fan_in)
    weight = jax.random.uniform(k_w, (2 * Cout, Cin, KH, KW), jnp.float32,
                                minval=-bound, maxval=bound)
    bias = jax.random.uniform(k_b, (2 * Cout,), jnp.float32,
                              minval=-bound, maxval=bound)

    out = gate_conv(x, weight, bias, padding=padding)
    jax.block_until_ready(out)

    ref = gate_conv_reference(x, weight, bias, padding=padding)
    assert out.shape == (N, Cout, H, W), out.shape
    assert jnp.allclose(out, ref, atol=2e-5, rtol=2e-5), "mismatch vs reference"

    print("KERNEL_OK")
</pallas_src>

<mosaic_0001>
module attributes {stable_mosaic.version = 11 : i64} {
  func.func @_gate_conv_kernel(%arg0: i32, %arg1: memref<2x8x512xf32, #tpu.memory_space<vmem>>, %arg2: memref<16x144xf32, #tpu.memory_space<vmem>>, %arg3: memref<16x1xf32, #tpu.memory_space<vmem>>, %arg4: memref<8x384xf32, #tpu.memory_space<vmem>>, %arg5: memref<144x384xf32, #tpu.memory_space<vmem>>) attributes {dimension_semantics = [#tpu.dimension_semantics<parallel>], iteration_bounds = array<i64: 1>, scalar_prefetch = 0 : i64, scratch_operands = 1 : i64, tpu.core_type = #tpu.core_type<tc>, window_params = [{transform_indices = @transform_0, window_bounds = array<i64: 2, 8, 512>}, {pipeline_mode = #tpu.pipeline_mode<synchronous>, transform_indices = @transform_1, window_bounds = array<i64: 16, 144>}, {pipeline_mode = #tpu.pipeline_mode<synchronous>, transform_indices = @transform_2, window_bounds = array<i64: 16, 1>}, {transform_indices = @transform_3, window_bounds = array<i64: 8, 384>}]} {
    %c0 = arith.constant 0 : index
    %c0_0 = arith.constant 0 : index
    %c0_1 = arith.constant 0 : index
    %0 = vector.load %arg1[%c0, %c0_0, %c0_1] : memref<2x8x512xf32, #tpu.memory_space<vmem>>, vector<1x8x384xf32>
    %1 = vector.shape_cast %0 : vector<1x8x384xf32> to vector<8x384xf32>
    %c0_2 = arith.constant 0 : index
    %c0_3 = arith.constant 0 : index
    %2 = vector.load %arg5[%c0_2, %c0_3] : memref<144x384xf32, #tpu.memory_space<vmem>>, vector<8x384xf32>
    tpu.vector_store %arg5[%c0_2, %c0_3], %1 {strides = array<i32>} : memref<144x384xf32, #tpu.memory_space<vmem>>, vector<8x384xf32>,
    %c0_4 = arith.constant 0 : index
    %c0_5 = arith.constant 0 : index
    %c1 = arith.constant 1 : index
    %3 = vector.load %arg1[%c0_4, %c0_5, %c1] : memref<2x8x512xf32, #tpu.memory_space<vmem>>, vector<1x8x384xf32>
    %4 = vector.shape_cast %3 : vector<1x8x384xf32> to vector<8x384xf32>
    %c8 = arith.constant 8 : index
    %c0_6 = arith.constant 0 : index
    %5 = vector.load %arg5[%c8, %c0_6] : memref<144x384xf32, #tpu.memory_space<vmem>>, vector<8x384xf32>
    tpu.vector_store %arg5[%c8, %c0_6], %4 {strides = array<i32>} : memref<144x384xf32, #tpu.memory_space<vmem>>, vector<8x384xf32>,
    %c0_7 = arith.constant 0 : index
    %c0_8 = arith.constant 0 : index
    %c2 = arith.constant 2 : index
    %6 = vector.load %arg1[%c0_7, %c0_8, %c2] : memref<2x8x512xf32, #tpu.memory_space<vmem>>, vector<1x8x384xf32>
    %7 = vector.shape_cast %6 : vector<1x8x384xf32> to vector<8x384xf32>
    %c16 = arith.constant 16 : index
    %c0_9 = arith.constant 0 : index
    %8 = vector.load %arg5[%c16, %c0_9] : memref<144x384xf32, #tpu.memory_space<vmem>>, vector<8x384xf32>
    tpu.vector_store %arg5[%c16, %c0_9], %7 {strides = array<i32>} : memref<144x384xf32, #tpu.memory_space<vmem>>, vector<8x384xf32>,
    %c0_10 = arith.constant 0 : index
    %c0_11 = arith.constant 0 : index
    %c18 = arith.constant 18 : index
    %9 = vector.load %arg1[%c0_10, %c0_11, %c18] : memref<2x8x512xf32, #tpu.memory_space<vmem>>, vector<1x8x384xf32>
    %10 = vector.shape_cast %9 : vector<1x8x384xf32> to vector<8x384xf32>
    %c24 = arith.constant 24 : index
    %c0_12 = arith.constant 0 : index
    %11 = vector.load %arg5[%c24, %c0_12] : memref<144x384xf32, #tpu.memory_space<vmem>>, vector<8x384xf32>
    tpu.vector_store %arg5[%c24, %c0_12], %10 {strides = array<i32>} : memref<144x384xf32, #tpu.memory_space<vmem>>, vector<8x384xf32>,
    %c0_13 = arith.constant 0 : index
    %c0_14 = arith.constant 0 : index
    %c19 = arith.constant 19 : index
    %12 = vector.load %arg1[%c0_13, %c0_14, %c19] : memref<2x8x512xf32, #tpu.memory_space<vmem>>, vector<1x8x384xf32>
    %13 = vector.shape_cast %12 : vector<1x8x384xf32> to vector<8x384xf32>
    %c32 = arith.constant 32 : index
    %c0_15 = arith.constant 0 : index
    %14 = vector.load %arg5[%c32, %c0_15] : memref<144x384xf32, #tpu.memory_space<vmem>>, vector<8x384xf32>
    tpu.vector_store %arg5[%c32, %c0_15], %13 {strides = array<i32>} : memref<144x384xf32, #tpu.memory_space<vmem>>, vector<8x384xf32>,
    %c0_16 = arith.constant 0 : index
    %c0_17 = arith.constant 0 : index
    %c20 = arith.constant 20 : index
    %15 = vector.load %arg1[%c0_16, %c0_17, %c20] : memref<2x8x512xf32, #tpu.memory_space<vmem>>, vector<1x8x384xf32>
    %16 = vector.shape_cast %15 : vector<1x8x384xf32> to vector<8x384xf32>
    %c40 = arith.constant 40 : index
    %c0_18 = arith.constant 0 : index
    %17 = vector.load %arg5[%c40, %c0_18] : memref<144x384xf32, #tpu.memory_space<vmem>>, vector<8x384xf32>
    tpu.vector_store %arg5[%c40, %c0_18], %16 {strides = array<i32>} : memref<144x384xf32, #tpu.memory_space<vmem>>, vector<8x384xf32>,
    %c0_19 = arith.constant 0 : index
    %c0_20 = arith.constant 0 : index
    %c36 = arith.constant 36 : index
    %18 = vector.load %arg1[%c0_19, %c0_20, %c36] : memref<2x8x512xf32, #tpu.memory_space<vmem>>, vector<1x8x384xf32>
    %19 = vector.shape_cast %18 : vector<1x8x384xf32> to vector<8x384xf32>
    %c48 = arith.constant 48 : index
    %c0_21 = arith.constant 0 : index
    %20 = vector.load %arg5[%c48, %c0_21] : memref<144x384xf32, #tpu.memory_space<vmem>>, vector<8x384xf32>
    tpu.vector_store %arg5[%c48, %c0_21], %19 {strides = array<i32>} : memref<144x384xf32, #tpu.memory_space<vmem>>, vector<8x384xf32>,
    %c0_22 = arith.constant 0 : index
    %c0_23 = arith.constant 0 : index
    %c37 = arith.constant 37 : index
    %21 = vector.load %arg1[%c0_22, %c0_23, %c37] : memref<2x8x512xf32, #tpu.memory_space<vmem>>, vector<1x8x384xf32>
    %22 = vector.shape_cast %21 : vector<1x8x384xf32> to vector<8x384xf32>
    %c56 = arith.constant 56 : index
    %c0_24 = arith.constant 0 : index
    %23 = vector.load %arg5[%c56, %c0_24] : memref<144x384xf32, #tpu.memory_space<vmem>>, vector<8x384xf32>
    tpu.vector_store %arg5[%c56, %c0_24], %22 {strides = array<i32>} : memref<144x384xf32, #tpu.memory_space<vmem>>, vector<8x384xf32>,
    %c0_25 = arith.constant 0 : index
    %c0_26 = arith.constant 0 : index
    %c38 = arith.constant 38 : index
    %24 = vector.load %arg1[%c0_25, %c0_26, %c38] : memref<2x8x512xf32, #tpu.memory_space<vmem>>, vector<1x8x384xf32>
    %25 = vector.shape_cast %24 : vector<1x8x384xf32> to vector<8x384xf32>
    %c64 = arith.constant 64 : index
    %c0_27 = arith.constant 0 : index
    %26 = vector.load %arg5[%c64, %c0_27] : memref<144x384xf32, #tpu.memory_space<vmem>>, vector<8x384xf32>
    tpu.vector_store %arg5[%c64, %c0_27], %25 {strides = array<i32>} : memref<144x384xf32, #tpu.memory_space<vmem>>, vector<8x384xf32>,
    %c1_28 = arith.constant 1 : index
    %c0_29 = arith.constant 0 : index
    %c0_30 = arith.constant 0 : index
    %27 = vector.load %arg1[%c1_28, %c0_29, %c0_30] : memref<2x8x512xf32, #tpu.memory_space<vmem>>, vector<1x8x384xf32>
    %28 = vector.shape_cast %27 : vector<1x8x384xf32> to vector<8x384xf32>
    %c72 = arith.constant 72 : index
    %c0_31 = arith.constant 0 : index
    %29 = vector.load %arg5[%c72, %c0_31] : memref<144x384xf32, #tpu.memory_space<vmem>>, vector<8x384xf32>
    tpu.vector_store %arg5[%c72, %c0_31], %28 {strides = array<i32>} : memref<144x384xf32, #tpu.memory_space<vmem>>, vector<8x384xf32>,
    %c1_32 = arith.constant 1 : index
    %c0_33 = arith.constant 0 : index
    %c1_34 = arith.constant 1 : index
    %30 = vector.load %arg1[%c1_32, %c0_33, %c1_34] : memref<2x8x512xf32, #tpu.memory_space<vmem>>, vector<1x8x384xf32>
    %31 = vector.shape_cast %30 : vector<1x8x384xf32> to vector<8x384xf32>
    %c80 = arith.constant 80 : index
    %c0_35 = arith.constant 0 : index
    %32 = vector.load %arg5[%c80, %c0_35] : memref<144x384xf32, #tpu.memory_space<vmem>>, vector<8x384xf32>
    tpu.vector_store %arg5[%c80, %c0_35], %31 {strides = array<i32>} : memref<144x384xf32, #tpu.memory_space<vmem>>, vector<8x384xf32>,
    %c1_36 = arith.constant 1 : index
    %c0_37 = arith.constant 0 : index
    %c2_38 = arith.constant 2 : index
    %33 = vector.load %arg1[%c1_36, %c0_37, %c2_38] : memref<2x8x512xf32, #tpu.memory_space<vmem>>, vector<1x8x384xf32>
    %34 = vector.shape_cast %33 : vector<1x8x384xf32> to vector<8x384xf32>
    %c88 = arith.constant 88 : index
    %c0_39 = arith.constant 0 : index
    %35 = vector.load %arg5[%c88, %c0_39] : memref<144x384xf32, #tpu.memory_space<vmem>>, vector<8x384xf32>
    tpu.vector_store %arg5[%c88, %c0_39], %34 {strides = array<i32>} : memref<144x384xf32, #tpu.memory_space<vmem>>, vector<8x384xf32>,
    %c1_40 = arith.constant 1 : index
    %c0_41 = arith.constant 0 : index
    %c18_42 = arith.constant 18 : index
    %36 = vector.load %arg1[%c1_40, %c0_41, %c18_42] : memref<2x8x512xf32, #tpu.memory_space<vmem>>, vector<1x8x384xf32>
    %37 = vector.shape_cast %36 : vector<1x8x384xf32> to vector<8x384xf32>
    %c96 = arith.constant 96 : index
    %c0_43 = arith.constant 0 : index
    %38 = vector.load %arg5[%c96, %c0_43] : memref<144x384xf32, #tpu.memory_space<vmem>>, vector<8x384xf32>
    tpu.vector_store %arg5[%c96, %c0_43], %37 {strides = array<i32>} : memref<144x384xf32, #tpu.memory_space<vmem>>, vector<8x384xf32>,
    %c1_44 = arith.constant 1 : index
    %c0_45 = arith.constant 0 : index
    %c19_46 = arith.constant 19 : index
    %39 = vector.load %arg1[%c1_44, %c0_45, %c19_46] : memref<2x8x512xf32, #tpu.memory_space<vmem>>, vector<1x8x384xf32>
    %40 = vector.shape_cast %39 : vector<1x8x384xf32> to vector<8x384xf32>
    %c104 = arith.constant 104 : index
    %c0_47 = arith.constant 0 : index
    %41 = vector.load %arg5[%c104, %c0_47] : memref<144x384xf32, #tpu.memory_space<vmem>>, vector<8x384xf32>
    tpu.vector_store %arg5[%c104, %c0_47], %40 {strides = array<i32>} : memref<144x384xf32, #tpu.memory_space<vmem>>, vector<8x384xf32>,
    %c1_48 = arith.constant 1 : index
    %c0_49 = arith.constant 0 : index
    %c20_50 = arith.constant 20 : index
    %42 = vector.load %arg1[%c1_48, %c0_49, %c20_50] : memref<2x8x512xf32, #tpu.memory_space<vmem>>, vector<1x8x384xf32>
    %43 = vector.shape_cast %42 : vector<1x8x384xf32> to vector<8x384xf32>
    %c112 = arith.constant 112 : index
    %c0_51 = arith.constant 0 : index
    %44 = vector.load %arg5[%c112, %c0_51] : memref<144x384xf32, #tpu.memory_space<vmem>>, vector<8x384xf32>
    tpu.vector_store %arg5[%c112, %c0_51], %43 {strides = array<i32>} : memref<144x384xf32, #tpu.memory_space<vmem>>, vector<8x384xf32>,
    %c1_52 = arith.constant 1 : index
    %c0_53 = arith.constant 0 : index
    %c36_54 = arith.constant 36 : index
    %45 = vector.load %arg1[%c1_52, %c0_53, %c36_54] : memref<2x8x512xf32, #tpu.memory_space<vmem>>, vector<1x8x384xf32>
    %46 = vector.shape_cast %45 : vector<1x8x384xf32> to vector<8x384xf32>
    %c120 = arith.constant 120 : index
    %c0_55 = arith.constant 0 : index
    %47 = vector.load %arg5[%c120, %c0_55] : memref<144x384xf32, #tpu.memory_space<vmem>>, vector<8x384xf32>
    tpu.vector_store %arg5[%c120, %c0_55], %46 {strides = array<i32>} : memref<144x384xf32, #tpu.memory_space<vmem>>, vector<8x384xf32>,
    %c1_56 = arith.constant 1 : index
    %c0_57 = arith.constant 0 : index
    %c37_58 = arith.constant 37 : index
    %48 = vector.load %arg1[%c1_56, %c0_57, %c37_58] : memref<2x8x512xf32, #tpu.memory_space<vmem>>, vector<1x8x384xf32>
    %49 = vector.shape_cast %48 : vector<1x8x384xf32> to vector<8x384xf32>
    %c128 = arith.constant 128 : index
    %c0_59 = arith.constant 0 : index
    %50 = vector.load %arg5[%c128, %c0_59] : memref<144x384xf32, #tpu.memory_space<vmem>>, vector<8x384xf32>
    tpu.vector_store %arg5[%c128, %c0_59], %49 {strides = array<i32>} : memref<144x384xf32, #tpu.memory_space<vmem>>, vector<8x384xf32>,
    %c1_60 = arith.constant 1 : index
    %c0_61 = arith.constant 0 : index
    %c38_62 = arith.constant 38 : index
    %51 = vector.load %arg1[%c1_60, %c0_61, %c38_62] : memref<2x8x512xf32, #tpu.memory_space<vmem>>, vector<1x8x384xf32>
    %52 = vector.shape_cast %51 : vector<1x8x384xf32> to vector<8x384xf32>
    %c136 = arith.constant 136 : index
    %c0_63 = arith.constant 0 : index
    %53 = vector.load %arg5[%c136, %c0_63] : memref<144x384xf32, #tpu.memory_space<vmem>>, vector<8x384xf32>
    tpu.vector_store %arg5[%c136, %c0_63], %52 {strides = array<i32>} : memref<144x384xf32, #tpu.memory_space<vmem>>, vector<8x384xf32>,
    %c0_64 = arith.constant 0 : index
    %c0_65 = arith.constant 0 : index
    %54 = vector.load %arg2[%c0_64, %c0_65] : memref<16x144xf32, #tpu.memory_space<vmem>>, vector<16x144xf32>
    %c0_66 = arith.constant 0 : index
    %c0_67 = arith.constant 0 : index
    %55 = vector.load %arg5[%c0_66, %c0_67] : memref<144x384xf32, #tpu.memory_space<vmem>>, vector<144x384xf32>
    %cst = arith.constant dense<0.000000e+00> : vector<16x384xf32>
    %56 = tpu.matmul %54, %55, %cst {dimension_numbers = #tpu.dot_dimension_numbers<[1], [0], [0], [1], [0, 0, 1, 1], [], []>} : vector<16x144xf32>, vector<144x384xf32>, vector<16x384xf32> -> vector<16x384xf32>
    %c0_68 = arith.constant 0 : index
    %c0_69 = arith.constant 0 : index
    %57 = vector.load %arg3[%c0_68, %c0_69] : memref<16x1xf32, #tpu.memory_space<vmem>>, vector<16x1xf32>
    %58 = vector.broadcast %57 : vector<16x1xf32> to vector<16x384xf32>
    %59 = arith.addf %56, %58 : vector<16x384xf32>
    %60 = vector.extract_strided_slice %59 {offsets = [0, 0], sizes = [8, 384], strides = [1, 1]} : vector<16x384xf32> to vector<8x384xf32>
    %61 = vector.extract_strided_slice %59 {offsets = [8, 0], sizes = [8, 384], strides = [1, 1]} : vector<16x384xf32> to vector<8x384xf32>
    %62 = arith.negf %61 : vector<8x384xf32>
    %63 = math.exp %62 : vector<8x384xf32>
    %cst_70 = arith.constant 1.000000e+00 : f32
    %64 = vector.broadcast %cst_70 : f32 to vector<8x384xf32>
    %65 = arith.addf %64, %63 : vector<8x384xf32>
    %66 = arith.divf %64, %65 : vector<8x384xf32>
    %67 = arith.mulf %60, %66 : vector<8x384xf32>
    %c0_71 = arith.constant 0 : index
    %c0_72 = arith.constant 0 : index
    %68 = vector.load %arg4[%c0_71, %c0_72] : memref<8x384xf32, #tpu.memory_space<vmem>>, vector<8x384xf32>
    tpu.vector_store %arg4[%c0_71, %c0_72], %67 {strides = array<i32>} : memref<8x384xf32, #tpu.memory_space<vmem>>, vector<8x384xf32>,
    return
  }
  func.func @transform_0(%arg0: i32) -> (i32, i32, i32) {
    %c0_i32 = arith.constant 0 : i32
    %c0_i32_0 = arith.constant 0 : i32
    %c0_i32_1 = arith.constant 0 : i32
    return %arg0, %c0_i32, %c0_i32_0 : i32, i32, i32
  }
  func.func @transform_1(%arg0: i32) -> (i32, i32) {
    %c0_i32 = arith.constant 0 : i32
    %c0_i32_0 = arith.constant 0 : i32
    %c0_i32_1 = arith.constant 0 : i32
    return %c0_i32, %c0_i32_0 : i32, i32
  }
  func.func @transform_2(%arg0: i32) -> (i32, i32) {
    %c0_i32 = arith.constant 0 : i32
    %c0_i32_0 = arith.constant 0 : i32
    %c0_i32_1 = arith.constant 0 : i32
    return %c0_i32, %c0_i32_0 : i32, i32
  }
  func.func @transform_3(%arg0: i32) -> (i32, i32) {
    %c0_i32 = arith.constant 0 : i32
    %c0_i32_0 = arith.constant 0 : i32
    return %arg0, %c0_i32 : i32, i32
  }
}

</mosaic_0001>

<llo_original>
// kernel: tpu_custom_call.1
$region0: #{tpu_custom_call.1}
  #allocation0 [shape = 'u32[]', space=smem, size = 0x4, offset = 0x4, fixed_abs, tag = 'smem constant byte address 0x4 - core index']
  #allocation1 [shape = 'u32[72,128]{1,0:T(1,128)}', space=vmem, size = 0x9000, scoped, tag = 'internal scratch']
  #allocation2 [shape = 'f32[144,384]{1,0:T(8,128)}', space=vmem, size = 0x36000, scoped, tag = 'scratch operand']
  %s0 = inlined_call_operand.hbm [shape: f32[2,8,512], index: 0, kind: input, shape index: {}]
  %s1 = inlined_call_operand.hbm [shape: f32[16,144], index: 1, kind: input, shape index: {}]
  %s2 = inlined_call_operand.vmem [shape: f32[16,1], index: 2, kind: input, shape index: {}]
  %s3 = inlined_call_operand.hbm [shape: f32[8,384], index: 3, kind: output, shape index: {}]
  %s4 = sld [smem:[#allocation0]]
  $region30: #{tpu_custom_call.1} parent=0
    _
  %s6 = ssub.s32 1, %s4
  %s7 = scalar_select 0, %s6, %s4
  $region1: #{tpu_custom_call.1} parent=0
    #allocation3 [shape = 'u8[32768]{0}', space=vmem, size = 0x8000, scoped, tag = 'input window, operand 0, single buffered']
    #allocation4 [shape = 's32[1]{0}', space=sflag, size = 0x4, scoped, tag = 'scoped memory for tpu_custom_call.1']
    #allocation5 [shape = 's32[1]{0}', space=sflag, size = 0x4, scoped, tag = 'scoped memory for tpu_custom_call.1']
    #allocation6 [shape = 'u8[16384]{0}', space=vmem, size = 0x4000, scoped, tag = 'input window, operand 1, single buffered']
    #allocation7 [shape = 's32[1]{0}', space=sflag, size = 0x4, scoped, tag = 'scoped memory for tpu_custom_call.1']
    #allocation8 [shape = 'u8[12288]{0}', space=vmem, size = 0x3000, scoped, tag = 'output window, operand 0, single buffered']
    %8 = vsyncpa [#allocation4], 0
    %9 = vsyncpa [#allocation7], 0
    %10 = vsyncpa [#allocation5], 0
    // Predicated region
    $region2: #{tpu_custom_call.1} parent=1 // pred_check
      _
    $region3: #{tpu_custom_call.1} parent=1 // pred_check_branch
      %12 = sbr.rel (0) target = $region5
    $region4: #{tpu_custom_call.1} parent=1 // pred_region
      %14 = vsyncadd [#allocation4], 0
      %s15 = sshll.u32 %s0, 4
      %s16 = int_to_ptr.hbm [resolvable:$true] %s15
      %s17 = sshll.u32 [#allocation3], 4
      %s18 = int_to_ptr.vmem [resolvable:$true] %s17
      %23 = dma.hbm_to_vmem [thread:$0]  %s16, 1024, %s18, [#allocation4], 512, 512, 32
    $region5: #{tpu_custom_call.1} parent=1 // pred_fallthru
      _
    // Predicated region
    $region6: #{tpu_custom_call.1} parent=1 // pred_check
      _
    $region7: #{tpu_custom_call.1} parent=1 // pred_check_branch
      %25 = sbr.rel (0) target = $region9
    $region8: #{tpu_custom_call.1} parent=1 // pred_region
      %27 = vsyncadd [#allocation7], 0
      %s28 = sshll.u32 %s1, 4
      %s29 = int_to_ptr.hbm [resolvable:$true] %s28
      %s30 = sshll.u32 [#allocation6], 4
      %s31 = int_to_ptr.vmem [resolvable:$true] %s30
      %36 = dma.hbm_to_vmem [thread:$0]  %s29, 512, %s31, [#allocation7], 256, 256, 16
    $region9: #{tpu_custom_call.1} parent=1 // pred_fallthru
      _
    // Predicated region
    $region10: #{tpu_custom_call.1} parent=1 // pred_check
      _
    $region11: #{tpu_custom_call.1} parent=1 // pred_check_branch
      %38 = sbr.rel (0) target = $region13
    $region12: #{tpu_custom_call.1} parent=1 // pred_region
      _
    $region13: #{tpu_custom_call.1} parent=1 // pred_fallthru
      _
    // Predicated region
    $region14: #{tpu_custom_call.1} parent=1 // pred_check
      _
    $region15: #{tpu_custom_call.1} parent=1 // pred_check_branch
      %40 = sbr.rel (0) target = $region17
    $region16: #{tpu_custom_call.1} parent=1 // pred_region
      %42 = dma.done [#allocation4], 1024
    $region17: #{tpu_custom_call.1} parent=1 // pred_fallthru
      _
    // Predicated region
    $region18: #{tpu_custom_call.1} parent=1 // pred_check
      _
    $region19: #{tpu_custom_call.1} parent=1 // pred_check_branch
      %44 = sbr.rel (0) target = $region21
    $region20: #{tpu_custom_call.1} parent=1 // pred_region
      %46 = dma.done [#allocation7], 512
    $region21: #{tpu_custom_call.1} parent=1 // pred_fallthru
      _
    %v47 = vld [vmem:[#allocation3] sm:$0xff]
    %v48 = vld [vmem:[#allocation3 + $0x8] sm:$0xff]
    %v49 = vld [vmem:[#allocation3 + $0x10] sm:$0xff]
    %50 = vst [vmem:[#allocation2] sm:$0xff] %v47
    %51 = vst [vmem:[#allocation2 + $0x8] sm:$0xff] %v48
    %52 = vst [vmem:[#allocation2 + $0x10] sm:$0xff] %v49
    %v53 = vld [vmem:[#allocation3] sm:$0xff]
    %v54 = vld [vmem:[#allocation3 + $0x8] sm:$0xff]
    %v55 = vld [vmem:[#allocation3 + $0x10] sm:$0xff]
    %v56 = vld [vmem:[#allocation3 + $0x18] sm:$0xff]
    %61 = vrot.lane.b32.xlu0 %v53, 127
    %v62 = vpop.permute.xlu0 %61
    %63 = vrot.lane.b32.xlu0 %v54, 127
    %v64 = vpop.permute.xlu0 %63
    %65 = vrot.lane.b32.xlu0 %v55, 127
    %v66 = vpop.permute.xlu0 %65
    %67 = vrot.lane.b32.xlu0 %v56, 127
    %v68 = vpop.permute.xlu0 %67
    %vm69 = vcmask 1039360
    %v70 = vsel %vm69, %v62, %v64
    %v71 = vsel %vm69, %v64, %v66
    %v72 = vsel %vm69, %v66, %v68
    %76 = vst [vmem:[#allocation2 + $0x18] sm:$0xff] %v70
    %77 = vst [vmem:[#allocation2 + $0x20] sm:$0xff] %v71
    %78 = vst [vmem:[#allocation2 + $0x28] sm:$0xff] %v72
    %v79 = vld [vmem:[#allocation3] sm:$0xff]
    %v80 = vld [vmem:[#allocation3 + $0x8] sm:$0xff]
    %v81 = vld [vmem:[#allocation3 + $0x10] sm:$0xff]
    %v82 = vld [vmem:[#allocation3 + $0x18] sm:$0xff]
    %87 = vrot.lane.b32.xlu0 %v79, 126
    %v88 = vpop.permute.xlu0 %87
    %89 = vrot.lane.b32.xlu0 %v80, 126
    %v90 = vpop.permute.xlu0 %89
    %91 = vrot.lane.b32.xlu0 %v81, 126
    %v92 = vpop.permute.xlu0 %91
    %93 = vrot.lane.b32.xlu0 %v82, 126
    %v94 = vpop.permute.xlu0 %93
    %vm95 = vcmask 1031168
    %v96 = vsel %vm95, %v88, %v90
    %v97 = vsel %vm95, %v90, %v92
    %v98 = vsel %vm95, %v92, %v94
    %102 = vst [vmem:[#allocation2 + $0x30] sm:$0xff] %v96
    %103 = vst [vmem:[#allocation2 + $0x38] sm:$0xff] %v97
    %104 = vst [vmem:[#allocation2 + $0x40] sm:$0xff] %v98
    %v105 = vld [vmem:[#allocation3] sm:$0xff]
    %v106 = vld [vmem:[#allocation3 + $0x8] sm:$0xff]
    %v107 = vld [vmem:[#allocation3 + $0x10] sm:$0xff]
    %v108 = vld [vmem:[#allocation3 + $0x18] sm:$0xff]
    %113 = vrot.lane.b32.xlu0 %v105, 110
    %v114 = vpop.permute.xlu0 %113
    %115 = vrot.lane.b32.xlu0 %v106, 110
    %v116 = vpop.permute.xlu0 %115
    %117 = vrot.lane.b32.xlu0 %v107, 110
    %v118 = vpop.permute.xlu0 %117
    %119 = vrot.lane.b32.xlu0 %v108, 110
    %v120 = vpop.permute.xlu0 %119
    %vm121 = vcmask 900096
    %v122 = vsel %vm121, %v114, %v116
    %v123 = vsel %vm121, %v116, %v118
    %v124 = vsel %vm121, %v118, %v120
    %128 = vst [vmem:[#allocation2 + $0x48] sm:$0xff] %v122
    %129 = vst [vmem:[#allocation2 + $0x50] sm:$0xff] %v123
    %130 = vst [vmem:[#allocation2 + $0x58] sm:$0xff] %v124
    %v131 = vld [vmem:[#allocation3] sm:$0xff]
    %v132 = vld [vmem:[#allocation3 + $0x8] sm:$0xff]
    %v133 = vld [vmem:[#allocation3 + $0x10] sm:$0xff]
    %v134 = vld [vmem:[#allocation3 + $0x18] sm:$0xff]
    %139 = vrot.lane.b32.xlu0 %v131, 109
    %v140 = vpop.permute.xlu0 %139
    %141 = vrot.lane.b32.xlu0 %v132, 109
    %v142 = vpop.permute.xlu0 %141
    %143 = vrot.lane.b32.xlu0 %v133, 109
    %v144 = vpop.permute.xlu0 %143
    %145 = vrot.lane.b32.xlu0 %v134, 109
    %v146 = vpop.permute.xlu0 %145
    %vm147 = vcmask 891904
    %v148 = vsel %vm147, %v140, %v142
    %v149 = vsel %vm147, %v142, %v144
    %v150 = vsel %vm147, %v144, %v146
    %154 = vst [vmem:[#allocation2 + $0x60] sm:$0xff] %v148
    %155 = vst [vmem:[#allocation2 + $0x68] sm:$0xff] %v149
    %156 = vst [vmem:[#allocation2 + $0x70] sm:$0xff] %v150
    %v157 = vld [vmem:[#allocation3] sm:$0xff]
    %v158 = vld [vmem:[#allocation3 + $0x8] sm:$0xff]
    %v159 = vld [vmem:[#allocation3 + $0x10] sm:$0xff]
    %v160 = vld [vmem:[#allocation3 + $0x18] sm:$0xff]
    %165 = vrot.lane.b32.xlu0 %v157, 108
    %v166 = vpop.permute.xlu0 %165
    %167 = vrot.lane.b32.xlu0 %v158, 108
    %v168 = vpop.permute.xlu0 %167
    %169 = vrot.lane.b32.xlu0 %v159, 108
    %v170 = vpop.permute.xlu0 %169
    %171 = vrot.lane.b32.xlu0 %v160, 108
    %v172 = vpop.permute.xlu0 %171
    %vm173 = vcmask 883712
    %v174 = vsel %vm173, %v166, %v168
    %v175 = vsel %vm173, %v168, %v170
    %v176 = vsel %vm173, %v170, %v172
    %180 = vst [vmem:[#allocation2 + $0x78] sm:$0xff] %v174
    %181 = vst [vmem:[#allocation2 + $0x80] sm:$0xff] %v175
    %182 = vst [vmem:[#allocation2 + $0x88] sm:$0xff] %v176
    %v183 = vld [vmem:[#allocation3] sm:$0xff]
    %v184 = vld [vmem:[#allocation3 + $0x8] sm:$0xff]
    %v185 = vld [vmem:[#allocation3 + $0x10] sm:$0xff]
    %v186 = vld [vmem:[#allocation3 + $0x18] sm:$0xff]
    %191 = vrot.lane.b32.xlu0 %v183, 92
    %v192 = vpop.permute.xlu0 %191
    %193 = vrot.lane.b32.xlu0 %v184, 92
    %v194 = vpop.permute.xlu0 %193
    %195 = vrot.lane.b32.xlu0 %v185, 92
    %v196 = vpop.permute.xlu0 %195
    %197 = vrot.lane.b32.xlu0 %v186, 92
    %v198 = vpop.permute.xlu0 %197
    %vm199 = vcmask 752640
    %v200 = vsel %vm199, %v192, %v194
    %v201 = vsel %vm199, %v194, %v196
    %v202 = vsel %vm199, %v196, %v198
    %206 = vst [vmem:[#allocation2 + $0x90] sm:$0xff] %v200
    %207 = vst [vmem:[#allocation2 + $0x98] sm:$0xff] %v201
    %208 = vst [vmem:[#allocation2 + $0xa0] sm:$0xff] %v202
    %v209 = vld [vmem:[#allocation3] sm:$0xff]
    %v210 = vld [vmem:[#allocation3 + $0x8] sm:$0xff]
    %v211 = vld [vmem:[#allocation3 + $0x10] sm:$0xff]
    %v212 = vld [vmem:[#allocation3 + $0x18] sm:$0xff]
    %217 = vrot.lane.b32.xlu0 %v209, 91
    %v218 = vpop.permute.xlu0 %217
    %219 = vrot.lane.b32.xlu0 %v210, 91
    %v220 = vpop.permute.xlu0 %219
    %221 = vrot.lane.b32.xlu0 %v211, 91
    %v222 = vpop.permute.xlu0 %221
    %223 = vrot.lane.b32.xlu0 %v212, 91
    %v224 = vpop.permute.xlu0 %223
    %vm225 = vcmask 744448
    %v226 = vsel %vm225, %v218, %v220
    %v227 = vsel %vm225, %v220, %v222
    %v228 = vsel %vm225, %v222, %v224
    %232 = vst [vmem:[#allocation2 + $0xa8] sm:$0xff] %v226
    %233 = vst [vmem:[#allocation2 + $0xb0] sm:$0xff] %v227
    %234 = vst [vmem:[#allocation2 + $0xb8] sm:$0xff] %v228
    %v235 = vld [vmem:[#allocation3] sm:$0xff]
    %v236 = vld [vmem:[#allocation3 + $0x8] sm:$0xff]
    %v237 = vld [vmem:[#allocation3 + $0x10] sm:$0xff]
    %v238 = vld [vmem:[#allocation3 + $0x18] sm:$0xff]
    %243 = vrot.lane.b32.xlu0 %v235, 90
    %v244 = vpop.permute.xlu0 %243
    %245 = vrot.lane.b32.xlu0 %v236, 90
    %v246 = vpop.permute.xlu0 %245
    %247 = vrot.lane.b32.xlu0 %v237, 90
    %v248 = vpop.permute.xlu0 %247
    %249 = vrot.lane.b32.xlu0 %v238, 90
    %v250 = vpop.permute.xlu0 %249
    %vm251 = vcmask 736256
    %v252 = vsel %vm251, %v244, %v246
    %v253 = vsel %vm251, %v246, %v248
    %v254 = vsel %vm251, %v248, %v250
    %258 = vst [vmem:[#allocation2 + $0xc0] sm:$0xff] %v252
    %259 = vst [vmem:[#allocation2 + $0xc8] sm:$0xff] %v253
    %260 = vst [vmem:[#allocation2 + $0xd0] sm:$0xff] %v254
    %s261 = scalar_lea.vmem [#allocation3], 32
    %v262 = vld [vmem:[%s261] sm:$0xff]
    %v263 = vld [vmem:[%s261 + $0x8] sm:$0xff]
    %v264 = vld [vmem:[%s261 + $0x10] sm:$0xff]
    %265 = vst [vmem:[#allocation2 + $0xd8] sm:$0xff] %v262
    %266 = vst [vmem:[#allocation2 + $0xe0] sm:$0xff] %v263
    %267 = vst [vmem:[#allocation2 + $0xe8] sm:$0xff] %v264
    %v268 = vld [vmem:[%s261] sm:$0xff]
    %v269 = vld [vmem:[%s261 + $0x8] sm:$0xff]
    %v270 = vld [vmem:[%s261 + $0x10] sm:$0xff]
    %v271 = vld [vmem:[%s261 + $0x18] sm:$0xff]
    %276 = vrot.lane.b32.xlu0 %v268, 127
    %v277 = vpop.permute.xlu0 %276
    %278 = vrot.lane.b32.xlu0 %v269, 127
    %v279 = vpop.permute.xlu0 %278
    %280 = vrot.lane.b32.xlu0 %v270, 127
    %v281 = vpop.permute.xlu0 %280
    %282 = vrot.lane.b32.xlu0 %v271, 127
    %v283 = vpop.permute.xlu0 %282
    %v284 = vsel %vm69, %v277, %v279
    %v285 = vsel %vm69, %v279, %v281
    %v286 = vsel %vm69, %v281, %v283
    %290 = vst [vmem:[#allocation2 + $0xf0] sm:$0xff] %v284
    %291 = vst [vmem:[#allocation2 + $0xf8] sm:$0xff] %v285
    %292 = vst [vmem:[#allocation2 + $0x100] sm:$0xff] %v286
    %v293 = vld [vmem:[%s261] sm:$0xff]
    %v294 = vld [vmem:[%s261 + $0x8] sm:$0xff]
    %v295 = vld [vmem:[%s261 + $0x10] sm:$0xff]
    %v296 = vld [vmem:[%s261 + $0x18] sm:$0xff]
    %301 = vrot.lane.b32.xlu0 %v293, 126
    %v302 = vpop.permute.xlu0 %301
    %303 = vrot.lane.b32.xlu0 %v294, 126
    %v304 = vpop.permute.xlu0 %303
    %305 = vrot.lane.b32.xlu0 %v295, 126
    %v306 = vpop.permute.xlu0 %305
    %307 = vrot.lane.b32.xlu0 %v296, 126
    %v308 = vpop.permute.xlu0 %307
    %v309 = vsel %vm95, %v302, %v304
    %v310 = vsel %vm95, %v304, %v306
    %v311 = vsel %vm95, %v306, %v308
    %315 = vst [vmem:[#allocation2 + $0x108] sm:$0xff] %v309
    %316 = vst [vmem:[#allocation2 + $0x110] sm:$0xff] %v310
    %317 = vst [vmem:[#allocation2 + $0x118] sm:$0xff] %v311
    %v318 = vld [vmem:[%s261] sm:$0xff]
    %v319 = vld [vmem:[%s261 + $0x8] sm:$0xff]
    %v320 = vld [vmem:[%s261 + $0x10] sm:$0xff]
    %v321 = vld [vmem:[%s261 + $0x18] sm:$0xff]
    %326 = vrot.lane.b32.xlu0 %v318, 110
    %v327 = vpop.permute.xlu0 %326
    %328 = vrot.lane.b32.xlu0 %v319, 110
    %v329 = vpop.permute.xlu0 %328
    %330 = vrot.lane.b32.xlu0 %v320, 110
    %v331 = vpop.permute.xlu0 %330
    %332 = vrot.lane.b32.xlu0 %v321, 110
    %v333 = vpop.permute.xlu0 %332
    %v334 = vsel %vm121, %v327, %v329
    %v335 = vsel %vm121, %v329, %v331
    %v336 = vsel %vm121, %v331, %v333
    %340 = vst [vmem:[#allocation2 + $0x120] sm:$0xff] %v334
    %341 = vst [vmem:[#allocation2 + $0x128] sm:$0xff] %v335
    %342 = vst [vmem:[#allocation2 + $0x130] sm:$0xff] %v336
    %v343 = vld [vmem:[%s261] sm:$0xff]
    %v344 = vld [vmem:[%s261 + $0x8] sm:$0xff]
    %v345 = vld [vmem:[%s261 + $0x10] sm:$0xff]
    %v346 = vld [vmem:[%s261 + $0x18] sm:$0xff]
    %351 = vrot.lane.b32.xlu0 %v343, 109
    %v352 = vpop.permute.xlu0 %351
    %353 = vrot.lane.b32.xlu0 %v344, 109
    %v354 = vpop.permute.xlu0 %353
    %355 = vrot.lane.b32.xlu0 %v345, 109
    %v356 = vpop.permute.xlu0 %355
    %357 = vrot.lane.b32.xlu0 %v346, 109
    %v358 = vpop.permute.xlu0 %357
    %v359 = vsel %vm147, %v352, %v354
    %v360 = vsel %vm147, %v354, %v356
    %v361 = vsel %vm147, %v356, %v358
    %365 = vst [vmem:[#allocation2 + $0x138] sm:$0xff] %v359
    %366 = vst [vmem:[#allocation2 + $0x140] sm:$0xff] %v360
    %367 = vst [vmem:[#allocation2 + $0x148] sm:$0xff] %v361
    %v368 = vld [vmem:[%s261] sm:$0xff]
    %v369 = vld [vmem:[%s261 + $0x8] sm:$0xff]
    %v370 = vld [vmem:[%s261 + $0x10] sm:$0xff]
    %v371 = vld [vmem:[%s261 + $0x18] sm:$0xff]
    %376 = vrot.lane.b32.xlu0 %v368, 108
    %v377 = vpop.permute.xlu0 %376
    %378 = vrot.lane.b32.xlu0 %v369, 108
    %v379 = vpop.permute.xlu0 %378
    %380 = vrot.lane.b32.xlu0 %v370, 108
    %v381 = vpop.permute.xlu0 %380
    %382 = vrot.lane.b32.xlu0 %v371, 108
    %v383 = vpop.permute.xlu0 %382
    %v384 = vsel %vm173, %v377, %v379
    %v385 = vsel %vm173, %v379, %v381
    %v386 = vsel %vm173, %v381, %v383
    %390 = vst [vmem:[#allocation2 + $0x150] sm:$0xff] %v384
    %391 = vst [vmem:[#allocation2 + $0x158] sm:$0xff] %v385
    %392 = vst [vmem:[#allocation2 + $0x160] sm:$0xff] %v386
    %v393 = vld [vmem:[%s261] sm:$0xff]
    %v394 = vld [vmem:[%s261 + $0x8] sm:$0xff]
    %v395 = vld [vmem:[%s261 + $0x10] sm:$0xff]
    %v396 = vld [vmem:[%s261 + $0x18] sm:$0xff]
    %401 = vrot.lane.b32.xlu0 %v393, 92
    %v402 = vpop.permute.xlu0 %401
    %403 = vrot.lane.b32.xlu0 %v394, 92
    %v404 = vpop.permute.xlu0 %403
    %405 = vrot.lane.b32.xlu0 %v395, 92
    %v406 = vpop.permute.xlu0 %405
    %407 = vrot.lane.b32.xlu0 %v396, 92
    %v408 = vpop.permute.xlu0 %407
    %v409 = vsel %vm199, %v402, %v404
    %v410 = vsel %vm199, %v404, %v406
    %v411 = vsel %vm199, %v406, %v408
    %415 = vst [vmem:[#allocation2 + $0x168] sm:$0xff] %v409
    %416 = vst [vmem:[#allocation2 + $0x170] sm:$0xff] %v410
    %417 = vst [vmem:[#allocation2 + $0x178] sm:$0xff] %v411
    %v418 = vld [vmem:[%s261] sm:$0xff]
    %v419 = vld [vmem:[%s261 + $0x8] sm:$0xff]
    %v420 = vld [vmem:[%s261 + $0x10] sm:$0xff]
    %v421 = vld [vmem:[%s261 + $0x18] sm:$0xff]
    %426 = vrot.lane.b32.xlu0 %v418, 91
    %v427 = vpop.permute.xlu0 %426
    %428 = vrot.lane.b32.xlu0 %v419, 91
    %v429 = vpop.permute.xlu0 %428
    %430 = vrot.lane.b32.xlu0 %v420, 91
    %v431 = vpop.permute.xlu0 %430
    %432 = vrot.lane.b32.xlu0 %v421, 91
    %v433 = vpop.permute.xlu0 %432
    %v434 = vsel %vm225, %v427, %v429
    %v435 = vsel %vm225, %v429, %v431
    %v436 = vsel %vm225, %v431, %v433
    %440 = vst [vmem:[#allocation2 + $0x180] sm:$0xff] %v434
    %441 = vst [vmem:[#allocation2 + $0x188] sm:$0xff] %v435
    %442 = vst [vmem:[#allocation2 + $0x190] sm:$0xff] %v436
    %v443 = vld [vmem:[%s261] sm:$0xff]
    %v444 = vld [vmem:[%s261 + $0x8] sm:$0xff]
    %v445 = vld [vmem:[%s261 + $0x10] sm:$0xff]
    %v446 = vld [vmem:[%s261 + $0x18] sm:$0xff]
    %451 = vrot.lane.b32.xlu0 %v443, 90
    %v452 = vpop.permute.xlu0 %451
    %453 = vrot.lane.b32.xlu0 %v444, 90
    %v454 = vpop.permute.xlu0 %453
    %455 = vrot.lane.b32.xlu0 %v445, 90
    %v456 = vpop.permute.xlu0 %455
    %457 = vrot.lane.b32.xlu0 %v446, 90
    %v458 = vpop.permute.xlu0 %457
    %v459 = vsel %vm251, %v452, %v454
    %v460 = vsel %vm251, %v454, %v456
    %v461 = vsel %vm251, %v456, %v458
    %465 = vst [vmem:[#allocation2 + $0x198] sm:$0xff] %v459
    %466 = vst [vmem:[#allocation2 + $0x1a0] sm:$0xff] %v460
    %467 = vst [vmem:[#allocation2 + $0x1a8] sm:$0xff] %v461
    %v468 = vld [vmem:[#allocation6] sm:$0xff]
    %v469 = vld [vmem:[#allocation6 + $0x8] sm:$0xff]
    %v470 = vld [vmem:[#allocation6 + $0x10] sm:$0xff]
    %v471 = vld [vmem:[#allocation6 + $0x18] sm:$0xff]
    %v472 = vld [vmem:[#allocation2] sm:$0xff]
    %v473 = vld [vmem:[#allocation2 + $0x8] sm:$0xff]
    %v474 = vld [vmem:[#allocation2 + $0x10] sm:$0xff]
    %v475 = vld [vmem:[#allocation2 + $0x18] sm:$0xff]
    %v476 = vld [vmem:[#allocation2 + $0x20] sm:$0xff]
    %v477 = vld [vmem:[#allocation2 + $0x28] sm:$0xff]
    %v478 = vld [vmem:[#allocation2 + $0x30] sm:$0xff]
    %v479 = vld [vmem:[#allocation2 + $0x38] sm:$0xff]
    %v480 = vld [vmem:[#allocation2 + $0x40] sm:$0xff]
    %v481 = vld [vmem:[#allocation2 + $0x48] sm:$0xff]
    %v482 = vld [vmem:[#allocation2 + $0x50] sm:$0xff]
    %v483 = vld [vmem:[#allocation2 + $0x58] sm:$0xff]
    %v484 = vld [vmem:[#allocation2 + $0x60] sm:$0xff]
    %v485 = vld [vmem:[#allocation2 + $0x68] sm:$0xff]
    %v486 = vld [vmem:[#allocation2 + $0x70] sm:$0xff]
    %v487 = vld [vmem:[#allocation2 + $0x78] sm:$0xff]
    %v488 = vld [vmem:[#allocation2 + $0x80] sm:$0xff]
    %v489 = vld [vmem:[#allocation2 + $0x88] sm:$0xff]
    %v490 = vld [vmem:[#allocation2 + $0x90] sm:$0xff]
    %v491 = vld [vmem:[#allocation2 + $0x98] sm:$0xff]
    %v492 = vld [vmem:[#allocation2 + $0xa0] sm:$0xff]
    %v493 = vld [vmem:[#allocation2 + $0xa8] sm:$0xff]
    %v494 = vld [vmem:[#allocation2 + $0xb0] sm:$0xff]
    %v495 = vld [vmem:[#allocation2 + $0xb8] sm:$0xff]
    %v496 = vld [vmem:[#allocation2 + $0xc0] sm:$0xff]
    %v497 = vld [vmem:[#allocation2 + $0xc8] sm:$0xff]
    %v498 = vld [vmem:[#allocation2 + $0xd0] sm:$0xff]
    %v499 = vld [vmem:[#allocation2 + $0xd8] sm:$0xff]
    %v500 = vld [vmem:[#allocation2 + $0xe0] sm:$0xff]
    %v501 = vld [vmem:[#allocation2 + $0xe8] sm:$0xff]
    %v502 = vld [vmem:[#allocation2 + $0xf0] sm:$0xff]
    %v503 = vld [vmem:[#allocation2 + $0xf8] sm:$0xff]
    %v504 = vld [vmem:[#allocation2 + $0x100] sm:$0xff]
    %v505 = vld [vmem:[#allocation2 + $0x108] sm:$0xff]
    %v506 = vld [vmem:[#allocation2 + $0x110] sm:$0xff]
    %v507 = vld [vmem:[#allocation2 + $0x118] sm:$0xff]
    %v508 = vld [vmem:[#allocation2 + $0x120] sm:$0xff]
    %v509 = vld [vmem:[#allocation2 + $0x128] sm:$0xff]
    %v510 = vld [vmem:[#allocation2 + $0x130] sm:$0xff]
    %v511 = vld [vmem:[#allocation2 + $0x138] sm:$0xff]
    %v512 = vld [vmem:[#allocation2 + $0x140] sm:$0xff]
    %v513 = vld [vmem:[#allocation2 + $0x148] sm:$0xff]
    %v514 = vld [vmem:[#allocation2 + $0x150] sm:$0xff]
    %v515 = vld [vmem:[#allocation2 + $0x158] sm:$0xff]
    %v516 = vld [vmem:[#allocation2 + $0x160] sm:$0xff]
    %v517 = vld [vmem:[#allocation2 + $0x168] sm:$0xff]
    %v518 = vld [vmem:[#allocation2 + $0x170] sm:$0xff]
    %v519 = vld [vmem:[#allocation2 + $0x178] sm:$0xff]
    %v520 = vld [vmem:[#allocation2 + $0x180] sm:$0xff]
    %v521 = vld [vmem:[#allocation2 + $0x188] sm:$0xff]
    %v522 = vld [vmem:[#allocation2 + $0x190] sm:$0xff]
    %v523 = vld [vmem:[#allocation2 + $0x198] sm:$0xff]
    %v524 = vld [vmem:[#allocation2 + $0x1a0] sm:$0xff]
    %v525 = vld [vmem:[#allocation2 + $0x1a8] sm:$0xff]
    %v526 = vld [vmem:[%s2] sm:$0xff]
    %v527 = vld [vmem:[%s2 + $0x8] sm:$0xff]
    %529 = vset.pattern.permute.xlu0 0
    %530 = vperm.xlu0 %529, %v526
    %v531 = vpop.permute.xlu0 %530
    %534 = vset.pattern.permute.xlu0 0
    %535 = vperm.xlu0 %534, %v527
    %v536 = vpop.permute.xlu0 %535
    %vm538 = vcmask 130048
    %v540 = vsel %vm538, %v469, 0
    %v543 = vsel %vm538, %v471, 0
    %545 = vmatpush.msra.mxu0 %v517
    %546 = vmatpush.msra.mxu0 %v514
    %547 = vmatpush.msra.mxu0 %v511
    %548 = vmatpush.msra.mxu0 %v508
    %549 = vmatpush.msra.mxu0 %v505
    %550 = vmatpush.msra.mxu0 %v502
    %551 = vmatpush.msra.mxu0 %v499
    %552 = vmatpush.msra.mxu0 %v496
    %553 = vmatpush.msra.mxu0 %v493
    %554 = vmatpush.msra.mxu0 %v490
    %555 = vmatpush.msra.mxu0 %v487
    %556 = vmatpush.msra.mxu0 %v484
    %557 = vmatpush.msra.mxu0 %v481
    %558 = vmatpush.msra.mxu0 %v478
    %559 = vmatpush.msra.mxu0 %v475
    %560 = vmatpush.msra.mxu0 %v472
    %561 = vmatmul.f32.gmra.mxu0 %v468
    %v562 = vpop.f32.mrf.mxu0
    %v563 = vadd.f32 %v531, %v562
    %564 = vmatmul.f32.gmra.mxu0 %v470
    %v565 = vpop.f32.mrf.mxu0
    %v566 = vadd.f32 %v536, %v565
    %567 = vdwg.mxu0
    %568 = vmatpush.msra.mxu0 0.0
    %569 = vmatpush.msra.mxu0 0.0
    %570 = vmatpush.msra.mxu0 0.0
    %571 = vmatpush.msra.mxu0 0.0
    %572 = vmatpush.msra.mxu0 0.0
    %573 = vmatpush.msra.mxu0 0.0
    %574 = vmatpush.msra.mxu0 0.0
    %575 = vmatpush.msra.mxu0 0.0
    %576 = vmatpush.msra.mxu0 0.0
    %577 = vmatpush.msra.mxu0 0.0
    %578 = vmatpush.msra.mxu0 0.0
    %579 = vmatpush.msra.mxu0 0.0
    %580 = vmatpush.msra.mxu0 0.0
    %581 = vmatpush.msra.mxu0 0.0
    %582 = vmatpush.msra.mxu0 %v523
    %583 = vmatpush.msra.mxu0 %v520
    %584 = vmatmul.f32.gmra.mxu0 %v540
    %v585 = vpop.f32.mrf.mxu0
    %v586 = vadd.f32 %v563, %v585
    %587 = vmatmul.f32.gmra.mxu0 %v543
    %v588 = vpop.f32.mrf.mxu0
    %v589 = vadd.f32 %v566, %v588
    %590 = vdwg.mxu0
    %591 = vmatpush.msra.mxu0 %v518
    %592 = vmatpush.msra.mxu0 %v515
    %593 = vmatpush.msra.mxu0 %v512
    %594 = vmatpush.msra.mxu0 %v509
    %595 = vmatpush.msra.mxu0 %v506
    %596 = vmatpush.msra.mxu0 %v503
    %597 = vmatpush.msra.mxu0 %v500
    %598 = vmatpush.msra.mxu0 %v497
    %599 = vmatpush.msra.mxu0 %v494
    %600 = vmatpush.msra.mxu0 %v491
    %601 = vmatpush.msra.mxu0 %v488
    %602 = vmatpush.msra.mxu0 %v485
    %603 = vmatpush.msra.mxu0 %v482
    %604 = vmatpush.msra.mxu0 %v479
    %605 = vmatpush.msra.mxu0 %v476
    %606 = vmatpush.msra.mxu0 %v473
    %607 = vmatmul.f32.gmra.mxu0 %v468
    %v608 = vpop.f32.mrf.mxu0
    %v609 = vadd.f32 %v531, %v608
    %610 = vmatmul.f32.gmra.mxu0 %v470
    %v611 = vpop.f32.mrf.mxu0
    %v612 = vadd.f32 %v536, %v611
    %613 = vdwg.mxu0
    %614 = vmatpush.msra.mxu0 0.0
    %615 = vmatpush.msra.mxu0 0.0
    %616 = vmatpush.msra.mxu0 0.0
    %617 = vmatpush.msra.mxu0 0.0
    %618 = vmatpush.msra.mxu0 0.0
    %619 = vmatpush.msra.mxu0 0.0
    %620 = vmatpush.msra.mxu0 0.0
    %621 = vmatpush.msra.mxu0 0.0
    %622 = vmatpush.msra.mxu0 0.0
    %623 = vmatpush.msra.mxu0 0.0
    %624 = vmatpush.msra.mxu0 0.0
    %625 = vmatpush.msra.mxu0 0.0
    %626 = vmatpush.msra.mxu0 0.0
    %627 = vmatpush.msra.mxu0 0.0
    %628 = vmatpush.msra.mxu0 %v524
    %629 = vmatpush.msra.mxu0 %v521
    %630 = vmatmul.f32.gmra.mxu0 %v540
    %v631 = vpop.f32.mrf.mxu0
    %v632 = vadd.f32 %v609, %v631
    %633 = vmatmul.f32.gmra.mxu0 %v543
    %v634 = vpop.f32.mrf.mxu0
    %v635 = vadd.f32 %v612, %v634
    %636 = vdwg.mxu0
    %637 = vmatpush.msra.mxu0 %v519
    %638 = vmatpush.msra.mxu0 %v516
    %639 = vmatpush.msra.mxu0 %v513
    %640 = vmatpush.msra.mxu0 %v510
    %641 = vmatpush.msra.mxu0 %v507
    %642 = vmatpush.msra.mxu0 %v504
    %643 = vmatpush.msra.mxu0 %v501
    %644 = vmatpush.msra.mxu0 %v498
    %645 = vmatpush.msra.mxu0 %v495
    %646 = vmatpush.msra.mxu0 %v492
    %647 = vmatpush.msra.mxu0 %v489
    %648 = vmatpush.msra.mxu0 %v486
    %649 = vmatpush.msra.mxu0 %v483
    %650 = vmatpush.msra.mxu0 %v480
    %651 = vmatpush.msra.mxu0 %v477
    %652 = vmatpush.msra.mxu0 %v474
    %653 = vmatmul.f32.gmra.mxu0 %v468
    %v654 = vpop.f32.mrf.mxu0
    %v655 = vadd.f32 %v531, %v654
    %656 = vmatmul.f32.gmra.mxu0 %v470
    %v657 = vpop.f32.mrf.mxu0
    %v658 = vadd.f32 %v536, %v657
    %659 = vdwg.mxu0
    %660 = vmatpush.msra.mxu0 0.0
    %661 = vmatpush.msra.mxu0 0.0
    %662 = vmatpush.msra.mxu0 0.0
    %663 = vmatpush.msra.mxu0 0.0
    %664 = vmatpush.msra.mxu0 0.0
    %665 = vmatpush.msra.mxu0 0.0
    %666 = vmatpush.msra.mxu0 0.0
    %667 = vmatpush.msra.mxu0 0.0
    %668 = vmatpush.msra.mxu0 0.0
    %669 = vmatpush.msra.mxu0 0.0
    %670 = vmatpush.msra.mxu0 0.0
    %671 = vmatpush.msra.mxu0 0.0
    %672 = vmatpush.msra.mxu0 0.0
    %673 = vmatpush.msra.mxu0 0.0
    %674 = vmatpush.msra.mxu0 %v525
    %675 = vmatpush.msra.mxu0 %v522
    %676 = vmatmul.f32.gmra.mxu0 %v540
    %v677 = vpop.f32.mrf.mxu0
    %v678 = vadd.f32 %v655, %v677
    %679 = vmatmul.f32.gmra.mxu0 %v543
    %v680 = vpop.f32.mrf.mxu0
    %v681 = vadd.f32 %v658, %v680
    %682 = vdwg.mxu0
    %v683 = vxor.u32 %v589, 2147483648
    %v684 = vxor.u32 %v635, 2147483648
    %v685 = vxor.u32 %v681, 2147483648
    %v686 = vmul.f32 %v683, 1.442695
    %v687 = vpow.pop %v686
    %v688 = vmul.f32 %v684, 1.442695
    %v689 = vpow.pop %v688
    %v690 = vmul.f32 %v685, 1.442695
    %v691 = vpow.pop %v690
    %v692 = vadd.f32 %v687, 1.0
    %v693 = vadd.f32 %v689, 1.0
    %v694 = vadd.f32 %v691, 1.0
    %v695 = vrcp.pop %v692
    %v696 = vmul.f32 %v692, %v695
    %v697 = vsub.f32 1.0, %v696
    %v698 = vmul.f32 %v695, %v697
    %v699 = vadd.f32 %v695, %v698
    %vm700 = vweird.f32 %v692
    %vm701 = vweird.f32 %v695
    %vm702 = vmor %vm700, %vm701
    %v703 = vsel %vm702, %v695, %v699
    %v704 = vand.u32 2147483647, %v692
    %vm705 = vcmp.eq.f32.partialorder %v704, 8.507059e+37
    %v706 = vand.u32 %v692, 2147483648
    %v707 = vor.u32 1.1754944e-38, %v706
    %v708 = vsel %vm705, %v707, %v703
    %v709 = vmul.f32 1.0, %v708
    %v710 = vrcp.pop %v693
    %v711 = vmul.f32 %v693, %v710
    %v712 = vsub.f32 1.0, %v711
    %v713 = vmul.f32 %v710, %v712
    %v714 = vadd.f32 %v710, %v713
    %vm715 = vweird.f32 %v693
    %vm716 = vweird.f32 %v710
    %vm717 = vmor %vm715, %vm716
    %v718 = vsel %vm717, %v710, %v714
    %v719 = vand.u32 2147483647, %v693
    %vm720 = vcmp.eq.f32.partialorder %v719, 8.507059e+37
    %v721 = vand.u32 %v693, 2147483648
    %v722 = vor.u32 1.1754944e-38, %v721
    %v723 = vsel %vm720, %v722, %v718
    %v724 = vmul.f32 1.0, %v723
    %v725 = vrcp.pop %v694
    %v726 = vmul.f32 %v694, %v725
    %v727 = vsub.f32 1.0, %v726
    %v728 = vmul.f32 %v725, %v727
    %v729 = vadd.f32 %v725, %v728
    %vm730 = vweird.f32 %v694
    %vm731 = vweird.f32 %v725
    %vm732 = vmor %vm730, %vm731
    %v733 = vsel %vm732, %v725, %v729
    %v734 = vand.u32 2147483647, %v694
    %vm735 = vcmp.eq.f32.partialorder %v734, 8.507059e+37
    %v736 = vand.u32 %v694, 2147483648
    %v737 = vor.u32 1.1754944e-38, %v736
    %v738 = vsel %vm735, %v737, %v733
    %v739 = vmul.f32 1.0, %v738
    %v740 = vmul.f32 %v586, %v709
    %v741 = vmul.f32 %v632, %v724
    %v742 = vmul.f32 %v678, %v739
    %743 = vst [vmem:[#allocation8] sm:$0xff] %v740
    %744 = vst [vmem:[#allocation8 + $0x8] sm:$0xff] %v741
    %745 = vst [vmem:[#allocation8 + $0x10] sm:$0xff] %v742
    // Predicated region
    $region22: #{tpu_custom_call.1} parent=1 // pred_check
      _
    $region23: #{tpu_custom_call.1} parent=1 // pred_check_branch
      %747 = sbr.rel (0) target = $region25
    $region24: #{tpu_custom_call.1} parent=1 // pred_region
      %749 = vsyncadd [#allocation5], 0
      %s751 = sshll.u32 [#allocation8], 4
      %s752 = int_to_ptr.vmem [resolvable:$true] %s751
      %s753 = sshll.u32 %s3, 4
      %s754 = int_to_ptr.hbm [resolvable:$true] %s753
      %756 = dma.vmem_to_hbm [thread:$0]  %s752, 384, %s754, [#allocation5]
    $region25: #{tpu_custom_call.1} parent=1 // pred_fallthru
      _
    // Predicated region
    $region26: #{tpu_custom_call.1} parent=1 // pred_check
      _
    $region27: #{tpu_custom_call.1} parent=1 // pred_check_branch
      %758 = sbr.rel (0) target = $region29
    $region28: #{tpu_custom_call.1} parent=1 // pred_region
      %760 = dma.done [#allocation5], 384
    $region29: #{tpu_custom_call.1} parent=1 // pred_fallthru
      _
    %761 = vsyncpa [#allocation4], 1
    %762 = vsyncpa [#allocation7], 1
    %763 = vsyncpa [#allocation5], 1

</llo_original>
